<compile_context>
chip_gen: v7x
topology: tpu7x:2x2x1
jax: 0.10.0
libtpu: 0.0.40
codegen_flags: <defaults>
</compile_context>

<pallas_src>
import functools

import jax
import jax.numpy as jnp
from jax.experimental import pallas as pl
from jax.experimental.pallas import tpu as pltpu


def _round_up(x, m):
    return ((x + m - 1) // m) * m


# ---------------------------------------------------------------------------
# Kernel A: fused projection over every timestep, lane-dense output.
#   z[0, j] = sum_h flat_t[h, j] * w[h, 0] + b
# flat_t block is (H, bt_tile): H on sublanes, BT on lanes.  VPU multiply +
# cross-sublane reduce (no 1-wide MXU matmul).
# ---------------------------------------------------------------------------
def _project_kernel(flat_ref, w_ref, b_ref, z_ref):
    x = flat_ref[...].astype(jnp.float32)          # upcast after DMA (bf16-friendly)
    z_ref[...] = jnp.sum(x * w_ref[...], axis=0, keepdims=True) + b_ref[...]


# ---------------------------------------------------------------------------
# Kernel B: vectorized gather of scalar logits + masked BCE, lane-dense tiles.
# ---------------------------------------------------------------------------
def _gather_bce_kernel(z_ref, idx_ref, tgt_ref, logit_ref, loss_ref,
                       *, n_valid, n_chunks):
    # z_ref    : (Zr, 128)  f32  all logits, resident (same block every step)
    # idx_ref  : (R, 128)   i32  label -> flat-timestep indices (lane-dense)
    # tgt_ref  : (R, 128)   f32  targets
    # logit_ref: (R, 128)   f32  output: gathered logits
    # loss_ref : (1, 128)   f32  output: per-tile BCE partial sums (lane-dense)
    t = pl.program_id(0)
    idx = idx_ref[...]
    rows = idx.shape[0]

    # Gather z[idx] as a scan over 128-wide z chunks: labels whose index falls
    # in [128c, 128c+128) pick their value via a within-vreg lane shuffle
    # (take_along_axis on matching (R,128) shapes); everything else is masked.
    def chunk_body(c, acc):
        z_chunk = z_ref[pl.ds(c, 1), :]                         # (1, 128)
        src = jnp.broadcast_to(z_chunk, (rows, 128))
        local = idx - c * 128
        in_rng = (local >= 0) & (local < 128)
        safe = jnp.where(in_rng, local, 0)
        vals = jnp.take_along_axis(src, safe, axis=-1,
                                   mode="promise_in_bounds")
        return acc + jnp.where(in_rng, vals, 0.0)

    z = jax.lax.fori_loop(0, n_chunks, chunk_body,
                          jnp.zeros((rows, 128), jnp.float32))

    # Validity mask: real labels vs. padded slots (padded slots are masked out
    # of the loss here; their logits are truncated in the wrapper).
    base = t * rows * 128
    pos = (base
           + jax.lax.broadcasted_iota(jnp.int32, (rows, 128), 0) * 128
           + jax.lax.broadcasted_iota(jnp.int32, (rows, 128), 1))
    valid = pos < n_valid

    tgt = tgt_ref[...]
    # BCE-with-logits (stable): max(z,0) - z*t + log1p(exp(-|z|)).
    # Compensated log1p with a GUARDED denominator: log1p(e) = log(u)*e/(u-1)
    # when u = 1+e > 1, else ~= e.  No 0*inf in the unselected branch.
    e = jnp.exp(-jnp.abs(z))
    u = 1.0 + e
    d = u - 1.0
    log1p_e = jnp.where(d > 0.0,
                        jnp.log(u) * (e / jnp.where(d > 0.0, d, 1.0)),
                        e)
    per = jnp.maximum(z, 0.0) - z * tgt + log1p_e
    per = jnp.where(valid, per, 0.0)

    logit_ref[...] = z
    loss_ref[...] = jnp.sum(per, axis=0, keepdims=True)


def labeler_task_forward(rnn_output, indices, targets, weight, bias,
                         *, max_bt_tile=4096, vmem_budget_bytes=12 << 20,
                         label_tile_rows=64):
    """Pallas implementation of LabelerTask.forward -> (logits, summed BCE loss)."""
    B, T, H = rnn_output.shape
    BT = B * T
    flat = rnn_output.reshape(BT, H)
    itemsize = jnp.dtype(flat.dtype).itemsize

    # ---- BT tiling: from a VMEM budget (2 double-buffered input blocks in the
    # source dtype + one f32 working copy), >= 2 grid steps whenever possible so
    # the "parallel" axis can shard across v7x's two TensorCores.
    per_row_bytes = H * (2 * itemsize + 8)
    bt_tile = (vmem_budget_bytes // per_row_bytes) // 128 * 128
    bt_tile = int(max(128, min(max_bt_tile, bt_tile)))
    bt128 = _round_up(BT, 128)
    bt_tile = min(bt_tile, bt128)
    if bt128 > 128 and pl.cdiv(bt128, bt_tile) < 2:
        bt_tile = _round_up(pl.cdiv(bt128, 2), 128)
    bt_pad = _round_up(BT, bt_tile)

    # Single wrapper copy over flat: transpose (H on sublanes, BT on lanes) with
    # the pad-to-tile fused in, kept in the ORIGINAL dtype.
    flat_t = jnp.pad(flat.T, ((0, 0), (0, bt_pad - BT)))
    w_col = weight.reshape(H, 1).astype(jnp.float32)
    b11 = bias.reshape(1, 1).astype(jnp.float32)

    z_row = pl.pallas_call(
        _project_kernel,
        out_shape=jax.ShapeDtypeStruct((1, bt_pad), jnp.float32),
        grid_spec=pltpu.PrefetchScalarGridSpec(
            num_scalar_prefetch=0,
            grid=(bt_pad // bt_tile,),
            in_specs=[
                pl.BlockSpec((H, bt_tile), lambda i: (0, i)),   # flat_t tile
                pl.BlockSpec((H, 1), lambda i: (0, 0)),         # weight column
                pl.BlockSpec((1, 1), lambda i: (0, 0)),         # bias
            ],
            out_specs=pl.BlockSpec((1, bt_tile), lambda i: (0, i)),
        ),
        compiler_params=pltpu.CompilerParams(
            dimension_semantics=("parallel",),
            vmem_limit_bytes=32 * 1024 * 1024),
    )(flat_t, w_col, b11)

    # NOTE: z for padded timesteps in [BT, bt_pad) equals `bias` (zero-padded
    # rows still get +b); harmless because no label index ever points there.
    zr = bt_pad // 128
    z_mat = z_row.reshape(zr, 128)        # lane-dense: flat index k -> (k//128, k%128)

    # ---- label-side layout: lane-dense (rows, 128) tiles ---------------------
    N = int(indices.shape[0])
    n_rows = max(1, pl.cdiv(N, 128))
    tile_rows = n_rows if n_rows <= label_tile_rows else label_tile_rows
    n_rows_pad = _round_up(n_rows, tile_rows)
    n_pad = n_rows_pad * 128
    num_lbl_tiles = n_rows_pad // tile_rows

    # Padded label slots point at flat index 0 (always valid); they are masked
    # out of the loss in-kernel and their logits truncated below.
    idx_mat = (jnp.zeros((n_pad,), jnp.int32)
               .at[:N].set(indices.astype(jnp.int32))
               .reshape(n_rows_pad, 128))
    tgt_mat = (jnp.zeros((n_pad,), jnp.float32)
               .at[:N].set(targets.astype(jnp.float32))
               .reshape(n_rows_pad, 128))

    kernel_b = functools.partial(_gather_bce_kernel,
                                 n_valid=N, n_chunks=pl.cdiv(BT, 128))

    logits_mat, loss_row = pl.pallas_call(
        kernel_b,
        out_shape=(jax.ShapeDtypeStruct((n_rows_pad, 128), jnp.float32),
                   jax.ShapeDtypeStruct((1, 128 * num_lbl_tiles), jnp.float32)),
        grid_spec=pltpu.PrefetchScalarGridSpec(
            num_scalar_prefetch=0,
            grid=(num_lbl_tiles,),
            in_specs=[
                pl.BlockSpec((zr, 128), lambda t: (0, 0)),            # z (resident)
                pl.BlockSpec((tile_rows, 128), lambda t: (t, 0)),     # indices
                pl.BlockSpec((tile_rows, 128), lambda t: (t, 0)),     # targets
            ],
            out_specs=(
                pl.BlockSpec((tile_rows, 128), lambda t: (t, 0)),     # logits
                pl.BlockSpec((1, 128), lambda t: (0, t)),             # loss partials
            ),
        ),
        compiler_params=pltpu.CompilerParams(
            dimension_semantics=("parallel",),
            vmem_limit_bytes=32 * 1024 * 1024),
    )(z_mat, idx_mat, tgt_mat)

    final = logits_mat.reshape(-1)[:N]     # == PyTorch `final.view((final.shape[0],))`
    loss = jnp.sum(loss_row)               # padding already zero-masked in-kernel
    return final, loss


if __name__ == "__main__":
    key = jax.random.PRNGKey(0)
    B, T, H = 2, 8, 32                     # config['size'] = 32
    N = 6                                  # number of (patient, day) labels
    k1, k2, k3, k4, k5 = jax.random.split(key, 5)

    rnn_output = jax.random.normal(k1, (B, T, H), jnp.float32)
    indices = jax.random.randint(k2, (N,), 0, B * T, jnp.int32)      # flat indices
    targets = jax.random.bernoulli(k3, 0.5, (N,)).astype(jnp.float32)

    # Deterministic synthetic parameters for nn.Linear(H, 1) (uniform +-1/sqrt(H)).
    bound = 1.0 / (H ** 0.5)
    weight = jax.random.uniform(k4, (1, H), jnp.float32, -bound, bound)
    bias = jax.random.uniform(k5, (1,), jnp.float32, -bound, bound)

    final, loss = labeler_task_forward(rnn_output, indices, targets, weight, bias)
    jax.block_until_ready((final, loss))

    # Pure-JAX reference (matches the PyTorch semantics).
    flat_ref = rnn_output.reshape(-1, H)
    z_ref = flat_ref[indices] @ weight[0] + bias[0]
    per_ref = (jnp.maximum(z_ref, 0.0) - z_ref * targets
               + jnp.log1p(jnp.exp(-jnp.abs(z_ref))))
    loss_ref = jnp.sum(per_ref)

    assert jnp.allclose(final, z_ref, atol=1e-5, rtol=1e-5)
    assert jnp.allclose(loss, loss_ref, atol=1e-5, rtol=1e-5)
    print("KERNEL_OK")
</pallas_src>

<mosaic_0001>
module attributes {stable_mosaic.version = 11 : i64} {
  func.func @_project_kernel(%arg0: i32, %arg1: memref<32x128xf32, #tpu.memory_space<vmem>>, %arg2: memref<32x1xf32, #tpu.memory_space<vmem>>, %arg3: memref<1x1xf32, #tpu.memory_space<vmem>>, %arg4: memref<1x128xf32, #tpu.memory_space<vmem>>) attributes {dimension_semantics = [#tpu.dimension_semantics<parallel>], iteration_bounds = array<i64: 1>, scalar_prefetch = 0 : i64, scratch_operands = 0 : i64, tpu.core_type = #tpu.core_type<tc>, window_params = [{transform_indices = @transform_0, window_bounds = array<i64: 32, 128>}, {pipeline_mode = #tpu.pipeline_mode<synchronous>, transform_indices = @transform_1, window_bounds = array<i64: 32, 1>}, {pipeline_mode = #tpu.pipeline_mode<synchronous>, transform_indices = @transform_2, window_bounds = array<i64: 1, 1>}, {transform_indices = @transform_3, window_bounds = array<i64: 1, 128>}]} {
    %c0 = arith.constant 0 : index
    %c0_0 = arith.constant 0 : index
    %0 = vector.load %arg1[%c0, %c0_0] : memref<32x128xf32, #tpu.memory_space<vmem>>, vector<32x128xf32>
    %c0_1 = arith.constant 0 : index
    %c0_2 = arith.constant 0 : index
    %1 = vector.load %arg2[%c0_1, %c0_2] : memref<32x1xf32, #tpu.memory_space<vmem>>, vector<32x1xf32>
    %2 = vector.broadcast %1 : vector<32x1xf32> to vector<32x128xf32>
    %3 = arith.mulf %0, %2 : vector<32x128xf32>
    %cst = arith.constant dense<0.000000e+00> : vector<128xf32>
    %4 = vector.multi_reduction <add>, %3, %cst [0] : vector<32x128xf32> to vector<128xf32>
    %5 = vector.shape_cast %4 : vector<128xf32> to vector<1x128xf32>
    %c0_3 = arith.constant 0 : index
    %c0_4 = arith.constant 0 : index
    %6 = vector.load %arg3[%c0_3, %c0_4] : memref<1x1xf32, #tpu.memory_space<vmem>>, vector<1x1xf32>
    %7 = vector.broadcast %6 : vector<1x1xf32> to vector<1x128xf32>
    %8 = arith.addf %5, %7 : vector<1x128xf32>
    %c0_5 = arith.constant 0 : index
    %c0_6 = arith.constant 0 : index
    %9 = vector.load %arg4[%c0_5, %c0_6] : memref<1x128xf32, #tpu.memory_space<vmem>>, vector<1x128xf32>
    tpu.vector_store %arg4[%c0_5, %c0_6], %8 {strides = array<i32>} : memref<1x128xf32, #tpu.memory_space<vmem>>, vector<1x128xf32>,
    return
  }
  func.func @transform_0(%arg0: i32) -> (i32, i32) {
    %c0_i32 = arith.constant 0 : i32
    %c0_i32_0 = arith.constant 0 : i32
    return %c0_i32, %arg0 : i32, i32
  }
  func.func @transform_1(%arg0: i32) -> (i32, i32) {
    %c0_i32 = arith.constant 0 : i32
    %c0_i32_0 = arith.constant 0 : i32
    %c0_i32_1 = arith.constant 0 : i32
    return %c0_i32, %c0_i32_0 : i32, i32
  }
  func.func @transform_2(%arg0: i32) -> (i32, i32) {
    %c0_i32 = arith.constant 0 : i32
    %c0_i32_0 = arith.constant 0 : i32
    %c0_i32_1 = arith.constant 0 : i32
    return %c0_i32, %c0_i32_0 : i32, i32
  }
  func.func @transform_3(%arg0: i32) -> (i32, i32) {
    %c0_i32 = arith.constant 0 : i32
    %c0_i32_0 = arith.constant 0 : i32
    return %c0_i32, %arg0 : i32, i32
  }
}

</mosaic_0001>

<llo_original>
// kernel: tpu_custom_call.1
$region0: #{tpu_custom_call.1}
  #allocation0 [shape = 'u32[]', space=smem, size = 0x4, offset = 0x4, fixed_abs, tag = 'smem constant byte address 0x4 - core index']
  #allocation1 [shape = 'u32[144,128]{1,0:T(1,128)}', space=vmem, size = 0x12000, scoped, tag = 'internal scratch']
  #allocation2 [shape = 'f32[1,1]{1,0:T(1,128)S(1)}', space=vmem, size = 0x200, scoped, tag = 'scoped memory for tpu_custom_call.1']
  %s0 = inlined_call_operand.vmem [shape: f32[32,128], index: 0, kind: input, shape index: {}]
  %s1 = inlined_call_operand.vmem [shape: f32[32,1], index: 1, kind: input, shape index: {}]
  %s2 = inlined_call_operand.<no memory space> [shape: f32[1,1], index: 2, kind: input, shape index: {}]
  %s3 = inlined_call_operand.hbm [shape: f32[1,128], index: 3, kind: output, shape index: {}]
  %s4 = sld [smem:[#allocation0]]
  $region22: #{tpu_custom_call.1} parent=0
    _
  %s6 = ssub.s32 1, %s4
  %s7 = scalar_select 0, %s6, %s4
  %v8 = vstv %s2
  %9 = vst [vmem:[#allocation2] sm:$0x1] %v8
  $region1: #{tpu_custom_call.1} parent=0
    #allocation3 [shape = 'u8[512]{0}', space=vmem, size = 0x400, scoped, tag = 'output window, operand 0, single buffered']
    #allocation4 [shape = 's32[1]{0}', space=sflag, size = 0x4, scoped, tag = 'scoped memory for tpu_custom_call.1']
    %10 = vsyncpa [#allocation4], 0
    // Predicated region
    $region2: #{tpu_custom_call.1} parent=1 // pred_check
      _
    $region3: #{tpu_custom_call.1} parent=1 // pred_check_branch
      %12 = sbr.rel (0) target = $region5
    $region4: #{tpu_custom_call.1} parent=1 // pred_region
      _
    $region5: #{tpu_custom_call.1} parent=1 // pred_fallthru
      _
    // Predicated region
    $region6: #{tpu_custom_call.1} parent=1 // pred_check
      _
    $region7: #{tpu_custom_call.1} parent=1 // pred_check_branch
      %14 = sbr.rel (0) target = $region9
    $region8: #{tpu_custom_call.1} parent=1 // pred_region
      _
    $region9: #{tpu_custom_call.1} parent=1 // pred_fallthru
      _
    // Predicated region
    $region10: #{tpu_custom_call.1} parent=1 // pred_check
      _
    $region11: #{tpu_custom_call.1} parent=1 // pred_check_branch
      %16 = sbr.rel (0) target = $region13
    $region12: #{tpu_custom_call.1} parent=1 // pred_region
      _
    $region13: #{tpu_custom_call.1} parent=1 // pred_fallthru
      _
    %v17 = vld [vmem:[%s0] sm:$0xff]
    %v18 = vld [vmem:[%s0 + $0x8] sm:$0xff]
    %v19 = vld [vmem:[%s0 + $0x10] sm:$0xff]
    %v20 = vld [vmem:[%s0 + $0x18] sm:$0xff]
    %v21 = vld [vmem:[%s1] sm:$0xff]
    %v22 = vld [vmem:[%s1 + $0x8] sm:$0xff]
    %v23 = vld [vmem:[%s1 + $0x10] sm:$0xff]
    %v24 = vld [vmem:[%s1 + $0x18] sm:$0xff]
    %26 = vset.pattern.permute.xlu0 0
    %27 = vperm.xlu0 %26, %v21
    %v28 = vpop.permute.xlu0 %27
    %31 = vset.pattern.permute.xlu0 0
    %32 = vperm.xlu0 %31, %v22
    %v33 = vpop.permute.xlu0 %32
    %36 = vset.pattern.permute.xlu0 0
    %37 = vperm.xlu0 %36, %v23
    %v38 = vpop.permute.xlu0 %37
    %41 = vset.pattern.permute.xlu0 0
    %42 = vperm.xlu0 %41, %v24
    %v43 = vpop.permute.xlu0 %42
    %v45 = vmul.f32 %v17, %v28
    %v46 = vmul.f32 %v18, %v33
    %v47 = vmul.f32 %v19, %v38
    %v48 = vmul.f32 %v20, %v43
    %v49 = vadd.f32 %v45, %v46
    %v50 = vadd.f32 %v49, %v47
    %v51 = vadd.f32 %v50, %v48
    %v52 = vrot.slane %v51, 4
    %v53 = vadd.f32 %v51, %v52
    %v54 = vrot.slane %v53, 2
    %v55 = vadd.f32 %v53, %v54
    %v56 = vrot.slane %v55, 1
    %v57 = vadd.f32 %v55, %v56
    %v58 = vld [vmem:[#allocation2] sm:$0x1]
    %60 = vset.pattern.permute.xlu0 0
    %61 = vperm.xlu0 %60, %v58
    %v62 = vpop.permute.xlu0 %61
    %v64 = vlaneseq
    %v65 = vshrl.u32 %v64, 7
    %v66 = vsub.s32 0, %v65
    %v67 = vrot.slane %v62, %v66
    %v68 = vadd.f32 %v57, %v67
    %69 = vst [vmem:[#allocation3] sm:$0x1] %v68
    // Predicated region
    $region14: #{tpu_custom_call.1} parent=1 // pred_check
      _
    $region15: #{tpu_custom_call.1} parent=1 // pred_check_branch
      %71 = sbr.rel (0) target = $region17
    $region16: #{tpu_custom_call.1} parent=1 // pred_region
      %s73 = ssub.s32 16, 16
      %74 = vsyncadd [#allocation4], %s73
      %s76 = sshll.u32 [#allocation3], 4
      %s77 = int_to_ptr.vmem [resolvable:$true] %s76
      %79 = dma.vmem_to_hbm [thread:$0]  %s77, 16, %s3, [#allocation4]
    $region17: #{tpu_custom_call.1} parent=1 // pred_fallthru
      _
    // Predicated region
    $region18: #{tpu_custom_call.1} parent=1 // pred_check
      _
    $region19: #{tpu_custom_call.1} parent=1 // pred_check_branch
      %81 = sbr.rel (0) target = $region21
    $region20: #{tpu_custom_call.1} parent=1 // pred_region
      %82 = dma.done [#allocation4], 16
    $region21: #{tpu_custom_call.1} parent=1 // pred_fallthru
      _
    %83 = vsyncpa [#allocation4], 1

</llo_original>
